<compile_context>
chip_gen: v5e
topology: v5e:2x2
jax: 0.10.0
libtpu: 0.0.40
codegen_flags: <defaults>
</compile_context>

<pallas_src>
import functools

import jax
import jax.numpy as jnp
from jax.experimental import pallas as pl
from jax.experimental.pallas import tpu as pltpu

ALPHA = 0.25
GAMMA = 2.0
# TODO(synk): class `weight` is None in this config; a per-class weight vector
# could be added as an extra (1, C) VMEM input if needed.
# TODO(synk): for very large C (vocab >= 16K) the class axis should also be
# tiled with an online logsumexp; not needed for this module's shapes.
# TODO(synk): on v7x, verify that dimension_semantics=("parallel",) shards the
# batch grid axis over both TensorCores; if not, switch to pltpu.CORE_PARALLEL.

_ROW_TILE_MAX = 8192
_MIN_CLASSES_FOR_KERNEL = 128   # below one 128-lane vreg the kernel is lane-starved


def _round_up(x, m):
    return ((x + m - 1) // m) * m


def _sublane_multiple(dtype):
    # 8 rows per 32-bit sublane tile; sub-32-bit dtypes pack along sublanes.
    return max(8, 32 // jnp.dtype(dtype).itemsize)


def _vmem_capacity_bytes():
    try:
        info = pltpu.get_tpu_info()
        return int(getattr(info, "vmem_capacity_bytes", 64 << 20))
    except Exception:
        return 64 << 20            # conservative (v7x-sized) fallback


def _working_set_bytes(tn, c_pad, itemsize):
    """Honest per-step VMEM accounting (double-buffered inputs + temporaries)."""
    logits_bufs = 2 * tn * c_pad * itemsize   # double-buffered logits block
    target_bufs = 2 * tn * 128 * 4            # (tn,1) int32 pads lanes to 128
    temps = 3 * tn * c_pad * 4                # exp / iota / select f32 temporaries
    out_bufs = 2 * 8 * 128 * 4
    return logits_bufs + target_bufs + temps + out_bufs


def _pick_row_tile(n, c, itemsize, sub, vmem_cap):
    """Largest sublane-aligned row tile fitting the generation's VMEM budget."""
    if vmem_cap <= (64 << 20):          # v7x: 64 MiB physical per TensorCore
        target_logits_bytes = 7 << 20   # amortize per-step overhead vs 3.2 TB/s HBM
        budget = 52 << 20               # leave headroom under physical VMEM
    else:                               # v5e / v6e: 128 MiB VMEM
        target_logits_bytes = 10 << 20
        budget = 96 << 20
    c_pad = _round_up(c, 128)
    per_row = 2 * c_pad * itemsize + 2 * 128 * 4 + 3 * c_pad * 4
    rows_by_budget = (budget // per_row) // sub * sub
    rows_by_target = (target_logits_bytes // max(c_pad * itemsize, 1)) // sub * sub
    tn = min(rows_by_budget, rows_by_target, _ROW_TILE_MAX, _round_up(n, sub))
    return int(max(sub, tn))


def _focal_loss_tile_kernel(logits_ref, targets_ref, out_ref, *, n_valid, row_tile):
    i = pl.program_id(0)
    last = pl.num_programs(0) - 1

    x = logits_ref[...]                                   # (TN, C)
    t = targets_ref[...]                                  # (TN, 1) int32
    tn, c = x.shape

    # Keep the big elementwise tiles in bf16 when the input is bf16 (VPU/EUP
    # are bf16-capable on v6e/v7x); accumulate reductions / scalars in f32.
    xm = x if x.dtype == jnp.bfloat16 else x.astype(jnp.float32)

    # Numerically-stable log-sum-exp (f32 accumulation of the exp-sum).
    m = jnp.max(xm, axis=-1, keepdims=True)               # (TN, 1)
    ex = jnp.exp(xm - m)                                   # (TN, C)
    lse = m.astype(jnp.float32) + jnp.log(
        jnp.sum(ex.astype(jnp.float32), axis=-1, keepdims=True))     # (TN, 1)

    # Gather the target logit with a select (no float one-hot tile, no MXU).
    # Exactly one nonzero per row, so the native-dtype sum is exact.
    lanes = jax.lax.broadcasted_iota(jnp.int32, (tn, c), 1)
    tgt_logit = jnp.sum(jnp.where(lanes == t, xm, 0.0), axis=-1,
                        keepdims=True).astype(jnp.float32)

    # Cross-entropy is mathematically >= 0; clamp tiny negative rounding so the
    # focal factor stays exact/NaN-free.
    ce = jnp.maximum(lse - tgt_logit, 0.0)                 # (TN, 1) f32
    pt = jnp.exp(-ce)
    one_m_pt = 1.0 - pt
    if GAMMA == 2.0:
        focal = ALPHA * jnp.square(one_m_pt) * ce          # one VPU multiply
    else:
        focal = ALPHA * jnp.maximum(one_m_pt, 0.0) ** GAMMA * ce

    def _write(total):
        # Lane-dense (8,128) tile per grid step -> unmasked vector stores.
        out_ref[...] = jnp.broadcast_to(total.reshape(1, 1), (8, 128))

    if n_valid % row_tile == 0:
        # No ragged rows anywhere: skip the mask entirely at trace time.
        _write(jnp.sum(focal))
    else:
        # Only the last tile has padded rows; gate the mask with pl.when so all
        # other tiles pay no per-row select.  The mask MUST stay a select (not
        # a multiply) so garbage/NaN in out-of-bounds rows cannot leak in.
        @pl.when(i == last)
        def _():
            rows = jax.lax.broadcasted_iota(jnp.int32, (tn, 1), 0) + i * row_tile
            _write(jnp.sum(jnp.where(rows < n_valid, focal, 0.0)))

        @pl.when(i != last)
        def _():
            _write(jnp.sum(focal))


def _focal_loss_xla(logits, targets):
    """Fused-XLA path (also the reference): log_softmax + gather + focal mean."""
    logits = logits.astype(jnp.float32)
    logp = jax.nn.log_softmax(logits, axis=-1)
    ce = -jnp.take_along_axis(logp, targets.astype(jnp.int32)[:, None], axis=-1)[:, 0]
    pt = jnp.exp(-ce)
    return jnp.mean(ALPHA * (1.0 - pt) ** GAMMA * ce)


def focal_loss_ref(logits, targets):
    """Pure-JAX reference mirroring torch.nn.functional.cross_entropy path."""
    return _focal_loss_xla(logits, targets)


def focal_loss(logits, targets, *, row_tile=None,
               min_classes_for_kernel=_MIN_CLASSES_FOR_KERNEL):
    """logits: (N, C) float (f32 or bf16), targets: (N,) int -> scalar float32."""
    n, c = logits.shape

    if c < min_classes_for_kernel:
        # Lane-starved shape (C smaller than one 128-lane vreg): per-step +
        # launch overhead dominate any Pallas win, so let XLA fuse it.
        return _focal_loss_xla(logits, targets)

    itemsize = jnp.dtype(logits.dtype).itemsize
    sub = _sublane_multiple(logits.dtype)
    vmem_cap = _vmem_capacity_bytes()
    if row_tile is not None:
        tn = max(sub, _round_up(int(row_tile), sub))
    else:
        tn = _pick_row_tile(n, c, itemsize, sub, vmem_cap)
    num_tiles = pl.cdiv(n, tn)

    # No wrapper-side padding of the (N, C) logits: the last block may be
    # ragged and is handled by the in-kernel select mask.
    targets2d = targets.astype(jnp.int32).reshape(n, 1)

    c_pad = _round_up(c, 128)
    working = _working_set_bytes(tn, c_pad, itemsize)
    cap = (52 << 20) if vmem_cap <= (64 << 20) else (100 << 20)
    vmem_limit = int(min(max(working + (8 << 20), 32 << 20), cap))

    partials = pl.pallas_call(
        functools.partial(_focal_loss_tile_kernel, n_valid=n, row_tile=tn),
        grid=(num_tiles,),
        out_shape=jax.ShapeDtypeStruct((num_tiles * 8, 128), jnp.float32),
        in_specs=[
            pl.BlockSpec((tn, c), lambda i: (i, 0)),
            pl.BlockSpec((tn, 1), lambda i: (i, 0)),
        ],
        out_specs=pl.BlockSpec((8, 128), lambda i: (i, 0)),
        compiler_params=pltpu.CompilerParams(
            dimension_semantics=("parallel",),
            vmem_limit_bytes=vmem_limit,
        ),
    )(logits, targets2d)

    # Tiny final reduction in the wrapper; divide by the true global N.
    return jnp.sum(partials[::8, 0]) / jnp.float32(n)


if __name__ == "__main__":
    key = jax.random.PRNGKey(0)
    k1, k2, k3, k4, k5, k6 = jax.random.split(key, 6)

    # 1) Single-tile kernel path (small but lane-dense: C = 128).
    N1, C1 = 16, 128
    logits1 = jax.random.normal(k1, (N1, C1), dtype=jnp.float32)
    targets1 = jax.random.randint(k2, (N1,), 0, C1, dtype=jnp.int32)
    out1 = jax.block_until_ready(focal_loss(logits1, targets1))
    ref1 = focal_loss_ref(logits1, targets1)
    assert jnp.allclose(out1, ref1, atol=1e-5, rtol=1e-5), (out1, ref1)

    # 2) Multi-tile grid + ragged last block (N % row_tile != 0), no padding.
    N2, C2 = 20, 256
    logits2 = jax.random.normal(k3, (N2, C2), dtype=jnp.float32)
    targets2 = jax.random.randint(k4, (N2,), 0, C2, dtype=jnp.int32)
    out2 = jax.block_until_ready(focal_loss(logits2, targets2, row_tile=8))
    ref2 = focal_loss_ref(logits2, targets2)
    assert jnp.allclose(out2, ref2, atol=1e-5, rtol=1e-5), (out2, ref2)

    # 3) bf16 kernel path (bf16 elementwise, f32 accumulation) - looser tol.
    logits3 = jax.random.normal(k5, (N1, C1), dtype=jnp.float32).astype(jnp.bfloat16)
    targets3 = jax.random.randint(k6, (N1,), 0, C1, dtype=jnp.int32)
    out3 = jax.block_until_ready(focal_loss(logits3, targets3))
    ref3 = focal_loss_ref(logits3, targets3)
    assert jnp.allclose(out3, ref3, atol=1e-2, rtol=5e-2), (out3, ref3)

    # 4) Small-C (lane-starved) shape dispatches to the fused XLA fallback.
    N4, C4 = 8, 16
    logits4 = jax.random.normal(k1, (N4, C4), dtype=jnp.float32)
    targets4 = jax.random.randint(k2, (N4,), 0, C4, dtype=jnp.int32)
    out4 = jax.block_until_ready(focal_loss(logits4, targets4))
    ref4 = focal_loss_ref(logits4, targets4)
    assert jnp.allclose(out4, ref4, atol=1e-6, rtol=1e-6), (out4, ref4)

    print("KERNEL_OK")
</pallas_src>

<mosaic_0001>
module attributes {stable_mosaic.version = 11 : i64} {
  func.func @_focal_loss_tile_kernel(%arg0: i32, %arg1: memref<16x128xf32, #tpu.memory_space<vmem>>, %arg2: memref<16x1xi32, #tpu.memory_space<vmem>>, %arg3: memref<8x128xf32, #tpu.memory_space<vmem>>) attributes {dimension_semantics = [#tpu.dimension_semantics<parallel>], iteration_bounds = array<i64: 1>, scalar_prefetch = 0 : i64, scratch_operands = 0 : i64, tpu.core_type = #tpu.core_type<tc>, window_params = [{transform_indices = @transform_0, window_bounds = array<i64: 16, 128>}, {transform_indices = @transform_1, window_bounds = array<i64: 16, 1>}, {transform_indices = @transform_2, window_bounds = array<i64: 8, 128>}]} {
    %c0 = arith.constant 0 : index
    %c0_0 = arith.constant 0 : index
    %0 = vector.load %arg1[%c0, %c0_0] : memref<16x128xf32, #tpu.memory_space<vmem>>, vector<16x128xf32>
    %c0_1 = arith.constant 0 : index
    %c0_2 = arith.constant 0 : index
    %1 = vector.load %arg2[%c0_1, %c0_2] : memref<16x1xi32, #tpu.memory_space<vmem>>, vector<16x1xi32>
    %cst = arith.constant dense<0xFF800000> : vector<16xf32>
    %2 = vector.multi_reduction <maximumf>, %0, %cst [1] : vector<16x128xf32> to vector<16xf32>
    %3 = vector.shape_cast %2 : vector<16xf32> to vector<16x1xf32>
    %4 = vector.broadcast %3 : vector<16x1xf32> to vector<16x128xf32>
    %5 = arith.subf %0, %4 : vector<16x128xf32>
    %6 = math.exp %5 : vector<16x128xf32>
    %cst_3 = arith.constant dense<0.000000e+00> : vector<16xf32>
    %7 = vector.multi_reduction <add>, %6, %cst_3 [1] : vector<16x128xf32> to vector<16xf32>
    %8 = vector.shape_cast %7 : vector<16xf32> to vector<16x1xf32>
    %9 = math.log %8 : vector<16x1xf32>
    %10 = arith.addf %3, %9 : vector<16x1xf32>
    %11 = tpu.iota {dimensions = array<i32: 1>} : vector<16x128xi32>
    %12 = vector.broadcast %1 : vector<16x1xi32> to vector<16x128xi32>
    %13 = arith.cmpi eq, %11, %12 : vector<16x128xi32>
    %cst_4 = arith.constant 0.000000e+00 : f32
    %14 = vector.broadcast %cst_4 : f32 to vector<16x128xf32>
    %15 = arith.select %13, %0, %14 : vector<16x128xi1>, vector<16x128xf32>
    %cst_5 = arith.constant dense<0.000000e+00> : vector<16xf32>
    %16 = vector.multi_reduction <add>, %15, %cst_5 [1] : vector<16x128xf32> to vector<16xf32>
    %17 = vector.shape_cast %16 : vector<16xf32> to vector<16x1xf32>
    %18 = arith.subf %10, %17 : vector<16x1xf32>
    %cst_6 = arith.constant 0.000000e+00 : f32
    %19 = vector.broadcast %cst_6 : f32 to vector<16x1xf32>
    %20 = arith.maximumf %18, %19 : vector<16x1xf32>
    %cst_7 = arith.constant 0.000000e+00 : f32
    %21 = vector.broadcast %cst_7 : f32 to vector<16x1xf32>
    %22 = arith.subf %21, %20 : vector<16x1xf32>
    %23 = math.exp %22 : vector<16x1xf32>
    %cst_8 = arith.constant 1.000000e+00 : f32
    %24 = vector.broadcast %cst_8 : f32 to vector<16x1xf32>
    %25 = arith.subf %24, %23 : vector<16x1xf32>
    %26 = arith.mulf %25, %25 : vector<16x1xf32>
    %cst_9 = arith.constant 2.500000e-01 : f32
    %27 = vector.broadcast %cst_9 : f32 to vector<16x1xf32>
    %28 = arith.mulf %27, %26 : vector<16x1xf32>
    %29 = arith.mulf %28, %20 : vector<16x1xf32>
    %30 = vector.shape_cast %29 : vector<16x1xf32> to vector<1x16x1xf32>
    %cst_10 = arith.constant dense<0.000000e+00> : vector<1xf32>
    %31 = vector.multi_reduction <add>, %30, %cst_10 [1, 2] : vector<1x16x1xf32> to vector<1xf32>
    %32 = vector.shape_cast %31 : vector<1xf32> to vector<1x1x1xf32>
    %33 = vector.extract %32[0, 0, 0] : f32 from vector<1x1x1xf32>
    %34 = vector.broadcast %33 : f32 to vector<1x1xf32>
    %35 = vector.shape_cast %34 : vector<1x1xf32> to vector<1x1xf32>
    %36 = vector.broadcast %35 : vector<1x1xf32> to vector<8x128xf32>
    %c0_11 = arith.constant 0 : index
    %c0_12 = arith.constant 0 : index
    %37 = vector.load %arg3[%c0_11, %c0_12] : memref<8x128xf32, #tpu.memory_space<vmem>>, vector<8x128xf32>
    tpu.vector_store %arg3[%c0_11, %c0_12], %36 {strides = array<i32>} : memref<8x128xf32, #tpu.memory_space<vmem>>, vector<8x128xf32>,
    return
  }
  func.func @transform_0(%arg0: i32) -> (i32, i32) {
    %c0_i32 = arith.constant 0 : i32
    %c0_i32_0 = arith.constant 0 : i32
    return %arg0, %c0_i32 : i32, i32
  }
  func.func @transform_1(%arg0: i32) -> (i32, i32) {
    %c0_i32 = arith.constant 0 : i32
    %c0_i32_0 = arith.constant 0 : i32
    return %arg0, %c0_i32 : i32, i32
  }
  func.func @transform_2(%arg0: i32) -> (i32, i32) {
    %c0_i32 = arith.constant 0 : i32
    %c0_i32_0 = arith.constant 0 : i32
    return %arg0, %c0_i32 : i32, i32
  }
}

</mosaic_0001>

<llo_original>
// kernel: tpu_custom_call.1
$region0: #{tpu_custom_call.1}
  #allocation0 [shape = 'u32[]', space=smem, size = 0x4, offset = 0x4, fixed_abs, tag = 'smem constant byte address 0x4 - core index']
  #allocation1 [shape = 'u32[72,128]{1,0:T(1,128)}', space=vmem, size = 0x9000, scoped, tag = 'internal scratch']
  %s0 = inlined_call_operand.vmem [shape: f32[16,128], index: 0, kind: input, shape index: {}]
  %s1 = inlined_call_operand.vmem [shape: s32[16,1], index: 1, kind: input, shape index: {}]
  %s2 = inlined_call_operand.hbm [shape: f32[8,128], index: 2, kind: output, shape index: {}]
  %s3 = sld [smem:[#allocation0]]
  $region18: #{tpu_custom_call.1} parent=0
    _
  %s5 = ssub.s32 1, %s3
  %s6 = scalar_select 0, %s5, %s3
  $region1: #{tpu_custom_call.1} parent=0
    #allocation2 [shape = 'u8[4096]{0}', space=vmem, size = 0x1000, scoped, tag = 'output window, operand 0, single buffered']
    #allocation3 [shape = 's32[1]{0}', space=sflag, size = 0x4, scoped, tag = 'scoped memory for tpu_custom_call.1']
    %7 = vsyncpa [#allocation3], 0
    // Predicated region
    $region2: #{tpu_custom_call.1} parent=1 // pred_check
      _
    $region3: #{tpu_custom_call.1} parent=1 // pred_check_branch
      %9 = sbr.rel (0) target = $region5
    $region4: #{tpu_custom_call.1} parent=1 // pred_region
      _
    $region5: #{tpu_custom_call.1} parent=1 // pred_fallthru
      _
    // Predicated region
    $region6: #{tpu_custom_call.1} parent=1 // pred_check
      _
    $region7: #{tpu_custom_call.1} parent=1 // pred_check_branch
      %11 = sbr.rel (0) target = $region9
    $region8: #{tpu_custom_call.1} parent=1 // pred_region
      _
    $region9: #{tpu_custom_call.1} parent=1 // pred_fallthru
      _
    %v12 = vld [vmem:[%s0] sm:$0xff]
    %v13 = vld [vmem:[%s0 + $0x8] sm:$0xff]
    %v14 = vld [vmem:[%s1] sm:$0xff]
    %v15 = vld [vmem:[%s1 + $0x8] sm:$0xff]
    %16 = vmax.xlane.f32.xlu0 %v12
    %v17 = vpop.xlane.xlu0 %16
    %18 = vmax.xlane.f32.xlu0 %v13
    %v19 = vpop.xlane.xlu0 %18
    %v20 = vsub.f32 %v12, %v17
    %v21 = vsub.f32 %v13, %v19
    %v22 = vmul.f32 %v20, 1.442695
    %v23 = vpow.pop %v22
    %v24 = vmul.f32 %v21, 1.442695
    %v25 = vpow.pop %v24
    %26 = vadd.xlane.f32.xlu0 %v23
    %v27 = vpop.xlane.xlu0 %26
    %28 = vadd.xlane.f32.xlu0 %v25
    %v29 = vpop.xlane.xlu0 %28
    %v30 = vlog2.pop %v27
    %v31 = vmul.f32 %v30, 0.6931472
    %v32 = vlog2.pop %v29
    %v33 = vmul.f32 %v32, 0.6931472
    %v34 = vadd.f32 %v17, %v31
    %v35 = vadd.f32 %v19, %v33
    %v36 = vlaneseq
    %v37 = vand.u32 %v36, 127
    %38 = vset.pattern.permute.xlu0 0
    %39 = vperm.xlu0 %38, %v14
    %v40 = vpop.permute.xlu0 %39
    %41 = vset.pattern.permute.xlu0 0
    %42 = vperm.xlu0 %41, %v15
    %v43 = vpop.permute.xlu0 %42
    %vm44 = vcmp.eq.s32.totalorder %v37, %v40
    %vm45 = vcmp.eq.s32.totalorder %v37, %v43
    %v46 = vsel %vm44, %v12, 0.0
    %v47 = vsel %vm45, %v13, 0.0
    %48 = vadd.xlane.f32.xlu0 %v46
    %v49 = vpop.xlane.xlu0 %48
    %50 = vadd.xlane.f32.xlu0 %v47
    %v51 = vpop.xlane.xlu0 %50
    %v52 = vsub.f32 %v34, %v49
    %v53 = vsub.f32 %v35, %v51
    %v54 = vmax.f32 %v52, 0.0
    %v55 = vmax.f32 %v53, 0.0
    %v56 = vsub.f32 0.0, %v54
    %v57 = vsub.f32 0.0, %v55
    %v58 = vmul.f32 %v56, 1.442695
    %v59 = vpow.pop %v58
    %v60 = vmul.f32 %v57, 1.442695
    %v61 = vpow.pop %v60
    %v62 = vsub.f32 1.0, %v59
    %v63 = vsub.f32 1.0, %v61
    %v64 = vmul.f32 %v62, %v62
    %v65 = vmul.f32 %v63, %v63
    %v66 = vmul.f32 %v64, 0.25
    %v67 = vmul.f32 %v65, 0.25
    %v68 = vmul.f32 %v66, %v54
    %v69 = vmul.f32 %v67, %v55
    %vm70 = vcmask 7168
    %v71 = vsel %vm70, %v68, 0.0
    %v72 = vsel %vm70, %v69, 0.0
    %v73 = vadd.f32 %v71, %v72
    %74 = vadd.xlane.f32.xlu0 %v73
    %v75 = vpop.xlane.xlu0 %74
    %v76 = vrot.slane %v75, 4
    %v77 = vadd.f32 %v75, %v76
    %v78 = vrot.slane %v77, 2
    %v79 = vadd.f32 %v77, %v78
    %v80 = vrot.slane %v79, 1
    %v81 = vadd.f32 %v79, %v80
    %s82 = vtos %v81
    %v83 = vstv %s82
    %84 = vst [vmem:[#allocation2] sm:$0xff] %v83
    // Predicated region
    $region10: #{tpu_custom_call.1} parent=1 // pred_check
      _
    $region11: #{tpu_custom_call.1} parent=1 // pred_check_branch
      %86 = sbr.rel (0) target = $region13
    $region12: #{tpu_custom_call.1} parent=1 // pred_region
      %88 = vsyncadd [#allocation3], 0
      %s90 = sshll.u32 [#allocation2], 4
      %s91 = int_to_ptr.vmem [resolvable:$true] %s90
      %s92 = sshll.u32 %s2, 4
      %s93 = int_to_ptr.hbm [resolvable:$true] %s92
      %95 = dma.vmem_to_hbm [thread:$0]  %s91, 128, %s93, [#allocation3]
    $region13: #{tpu_custom_call.1} parent=1 // pred_fallthru
      _
    // Predicated region
    $region14: #{tpu_custom_call.1} parent=1 // pred_check
      _
    $region15: #{tpu_custom_call.1} parent=1 // pred_check_branch
      %97 = sbr.rel (0) target = $region17
    $region16: #{tpu_custom_call.1} parent=1 // pred_region
      %99 = dma.done [#allocation3], 128
    $region17: #{tpu_custom_call.1} parent=1 // pred_fallthru
      _
    %100 = vsyncpa [#allocation3], 1

</llo_original>
